<compile_context>
chip_gen: v5e
topology: v5e:2x2
jax: 0.10.0
libtpu: 0.0.40
codegen_flags: <defaults>
</compile_context>

<pallas_src>
import functools

import jax
import jax.numpy as jnp
from jax.experimental import pallas as pl
from jax.experimental.pallas import tpu as pltpu

_NEG_BIG = -1e30  # "minus infinity" that stays finite under arithmetic


def _gap_kernel(feat_ref, w_ref, b_ref, out_ref, m_ref, l_ref, acc_ref, *,
                n_rows):
    k = pl.program_id(1)

    @pl.when(k == 0)
    def _init():
        m_ref[...] = jnp.full_like(m_ref, _NEG_BIG)
        l_ref[...] = jnp.zeros_like(l_ref)
        acc_ref[...] = jnp.zeros_like(acc_ref)

    feat = feat_ref[...].astype(jnp.float32)              # (BT, TN, D)
    bt, tn, d = feat.shape
    w_row = w_ref[...].astype(jnp.float32).reshape(1, 1, d)
    bias = b_ref[0, 0]                                     # SMEM scalar

    needs_mask = (n_rows % tn) != 0
    if needs_mask:
        row_ids = jax.lax.broadcasted_iota(jnp.int32, (1, tn, 1), 1) + k * tn
        valid = row_ids < n_rows                            # (1, TN, 1)
        feat = jnp.where(valid, feat, 0.0)

    # Gate logits: VPU multiply + lane reduce (avoids a width-1 MXU matmul).
    logits = jnp.sum(feat * w_row, axis=-1, keepdims=True) + bias  # (BT,TN,1)
    if needs_mask:
        logits = jnp.where(valid, logits, _NEG_BIG)

    # Online softmax update over the node tiles.
    m_prev = m_ref[...]                                     # (BT, 1, 1)
    m_new = jnp.maximum(m_prev, jnp.max(logits, axis=1, keepdims=True))
    alpha = jnp.exp(m_prev - m_new)                         # (BT, 1, 1)
    p = jnp.exp(logits - m_new)                             # (BT, TN, 1)
    l_ref[...] = alpha * l_ref[...] + jnp.sum(p, axis=1, keepdims=True)
    acc_ref[...] = alpha * acc_ref[...] + jnp.sum(feat * p, axis=1,
                                                  keepdims=True)
    m_ref[...] = m_new

    @pl.when(k == pl.num_programs(1) - 1)
    def _finalize():
        # Exact reciprocal; runs once per batch block so cost is negligible.
        inv = pl.reciprocal(l_ref[...], approx=False)       # (BT, 1, 1)
        out_ref[...] = (acc_ref[...] * inv).astype(out_ref.dtype)


def _pick_block_batch(batch, max_bt=8):
    """Largest divisor of `batch` <= max_bt (amortizes per-grid-step overhead)."""
    bt = 1
    for c in range(1, min(batch, max_bt) + 1):
        if batch % c == 0:
            bt = c
    return bt


def _pick_block_rows(n, d, bt, itemsize, budget_bytes=4 << 20):
    """Pick node-tile rows so one feat buffer is ~<= 4 MiB (double-buffered ->
    ~8 MiB): safe on v7x (64 MiB VMEM) and within v5e's 16 MiB scoped default."""
    max_rows = max(8, budget_bytes // max(1, bt * d * itemsize))
    tn = (max_rows // 8) * 8
    tn = min(tn, ((n + 7) // 8) * 8)
    return max(tn, 8)


def global_attention_pooling(feat, w, b, *, block_rows=None, block_batch=None):
    """feat: (B, N, D); w: (1, D) (PyTorch Linear weight layout); b: (1, 1).

    Returns (B, 1, D): softmax(feat @ w.T + b) over N, then the gate-weighted
    sum of feat over N, per batch element."""
    B, N, D = feat.shape
    w = jnp.asarray(w).reshape(1, D)
    b = jnp.asarray(b, dtype=jnp.float32).reshape(1, 1)

    bt = block_batch if block_batch is not None else _pick_block_batch(B)
    assert B % bt == 0, "block_batch must divide the batch size"
    tn = block_rows if block_rows is not None else _pick_block_rows(
        N, D, bt, jnp.dtype(feat.dtype).itemsize)

    kernel = functools.partial(_gap_kernel, n_rows=N)
    return pl.pallas_call(
        kernel,
        out_shape=jax.ShapeDtypeStruct((B, 1, D), feat.dtype),
        grid_spec=pltpu.PrefetchScalarGridSpec(
            num_scalar_prefetch=0,
            grid=(B // bt, pl.cdiv(N, tn)),
            in_specs=[
                pl.BlockSpec((bt, tn, D), lambda bb, k: (bb, k, 0)),  # feat
                pl.BlockSpec((1, D), lambda bb, k: (0, 0)),           # gate W
                pl.BlockSpec(memory_space=pltpu.MemorySpace.SMEM),    # bias
            ],
            out_specs=pl.BlockSpec((bt, 1, D), lambda bb, k: (bb, 0, 0)),
            scratch_shapes=[
                pltpu.VMEM((bt, 1, 1), jnp.float32),   # running max  m
                pltpu.VMEM((bt, 1, 1), jnp.float32),   # running sum  l
                pltpu.VMEM((bt, 1, D), jnp.float32),   # running weighted acc
            ],
        ),
        compiler_params=pltpu.CompilerParams(
            dimension_semantics=("parallel", "arbitrary"),
            vmem_limit_bytes=32 * 1024 * 1024,
        ),
    )(feat, w, b)


def _reference(feat, w, b):
    logits = jnp.einsum("bnd,od->bno", feat, w) + b[0, 0]      # (B, N, 1)
    gate = jax.nn.softmax(logits, axis=1)                      # softmax over N
    return jnp.sum(feat * gate, axis=1, keepdims=True)         # (B, 1, D)


if __name__ == "__main__":
    B, N, D = 2, 20, 32
    key = jax.random.PRNGKey(0)
    k_feat, k_w, k_b = jax.random.split(key, 3)

    feat = jax.random.normal(k_feat, (B, N, D), dtype=jnp.float32)
    # gate_nn = nn.Linear(D, 1): weight (1, D), bias (1,)
    w = jax.random.normal(k_w, (1, D), dtype=jnp.float32) * (1.0 / jnp.sqrt(D))
    b = jax.random.normal(k_b, (1, 1), dtype=jnp.float32) * 0.1

    ref = _reference(feat, w, b)

    # Auto-picked tiles (single ragged node tile, BT=2 batch block).
    out = jax.block_until_ready(global_attention_pooling(feat, w, b))
    assert out.shape == (B, 1, D)
    assert jnp.allclose(out, ref, atol=1e-5, rtol=1e-5), "mismatch (auto tiles)"

    # Forced small tiles: exercises multi-step online-softmax accumulation and
    # the ragged last tile (20 % 8 != 0).
    out2 = jax.block_until_ready(
        global_attention_pooling(feat, w, b, block_rows=8, block_batch=1))
    assert jnp.allclose(out2, ref, atol=1e-5, rtol=1e-5), "mismatch (tiled N)"

    print("KERNEL_OK")
</pallas_src>

<mosaic_0001>
module attributes {stable_mosaic.version = 11 : i64} {
  func.func @_gap_kernel(%arg0: i32, %arg1: i32, %arg2: memref<2x24x32xf32, #tpu.memory_space<vmem>>, %arg3: memref<1x32xf32, #tpu.memory_space<vmem>>, %arg4: memref<1x1xf32, #tpu.memory_space<smem>>, %arg5: memref<2x1x32xf32, #tpu.memory_space<vmem>>, %arg6: memref<2x1x1xf32, #tpu.memory_space<vmem>>, %arg7: memref<2x1x1xf32, #tpu.memory_space<vmem>>, %arg8: memref<2x1x32xf32, #tpu.memory_space<vmem>>) attributes {dimension_semantics = [#tpu.dimension_semantics<parallel>, #tpu.dimension_semantics<arbitrary>], iteration_bounds = array<i64: 1, 1>, scalar_prefetch = 0 : i64, scratch_operands = 3 : i64, tpu.core_type = #tpu.core_type<tc>, window_params = [{transform_indices = @transform_0, window_bounds = array<i64: 2, 24, 32>}, {pipeline_mode = #tpu.pipeline_mode<synchronous>, transform_indices = @transform_1, window_bounds = array<i64: 1, 32>}, {transform_indices = @transform_2, window_bounds = array<i64: 1, 1>}, {transform_indices = @transform_3, window_bounds = array<i64: 2, 1, 32>}]} {
    %c0_i32 = arith.constant 0 : i32
    %0 = arith.cmpi eq, %arg1, %c0_i32 : i32
    %1 = arith.extui %0 : i1 to i32
    %c0_i32_0 = arith.constant 0 : i32
    %2 = arith.cmpi ne, %1, %c0_i32_0 : i32
    scf.if %2 {
      %cst_32 = arith.constant -1.000000e+30 : f32
      %55 = vector.broadcast %cst_32 : f32 to vector<2x1x1xf32>
      %c0_33 = arith.constant 0 : index
      %c0_34 = arith.constant 0 : index
      %c0_35 = arith.constant 0 : index
      %56 = vector.load %arg6[%c0_33, %c0_34, %c0_35] : memref<2x1x1xf32, #tpu.memory_space<vmem>>, vector<2x1x1xf32>
      tpu.vector_store %arg6[%c0_33, %c0_34, %c0_35], %55 {strides = array<i32>} : memref<2x1x1xf32, #tpu.memory_space<vmem>>, vector<2x1x1xf32>,
      %cst_36 = arith.constant 0.000000e+00 : f32
      %57 = vector.broadcast %cst_36 : f32 to vector<2x1x1xf32>
      %c0_37 = arith.constant 0 : index
      %c0_38 = arith.constant 0 : index
      %c0_39 = arith.constant 0 : index
      %58 = vector.load %arg7[%c0_37, %c0_38, %c0_39] : memref<2x1x1xf32, #tpu.memory_space<vmem>>, vector<2x1x1xf32>
      tpu.vector_store %arg7[%c0_37, %c0_38, %c0_39], %57 {strides = array<i32>} : memref<2x1x1xf32, #tpu.memory_space<vmem>>, vector<2x1x1xf32>,
      %cst_40 = arith.constant 0.000000e+00 : f32
      %59 = vector.broadcast %cst_40 : f32 to vector<2x1x32xf32>
      %c0_41 = arith.constant 0 : index
      %c0_42 = arith.constant 0 : index
      %c0_43 = arith.constant 0 : index
      %60 = vector.load %arg8[%c0_41, %c0_42, %c0_43] : memref<2x1x32xf32, #tpu.memory_space<vmem>>, vector<2x1x32xf32>
      tpu.vector_store %arg8[%c0_41, %c0_42, %c0_43], %59 {strides = array<i32>} : memref<2x1x32xf32, #tpu.memory_space<vmem>>, vector<2x1x32xf32>,
    } else {
    }
    %c0 = arith.constant 0 : index
    %c0_1 = arith.constant 0 : index
    %c0_2 = arith.constant 0 : index
    %3 = vector.load %arg2[%c0, %c0_1, %c0_2] : memref<2x24x32xf32, #tpu.memory_space<vmem>>, vector<2x24x32xf32>
    %c0_3 = arith.constant 0 : index
    %c0_4 = arith.constant 0 : index
    %4 = vector.load %arg3[%c0_3, %c0_4] : memref<1x32xf32, #tpu.memory_space<vmem>>, vector<1x32xf32>
    %5 = vector.shape_cast %4 : vector<1x32xf32> to vector<1x1x32xf32>
    %c0_5 = arith.constant 0 : index
    %c0_6 = arith.constant 0 : index
    %6 = memref.load %arg4[%c0_5, %c0_6] : memref<1x1xf32, #tpu.memory_space<smem>>
    %7 = tpu.iota {dimensions = array<i32: 1>} : vector<1x24x1xi32>
    %c24_i32 = arith.constant 24 : i32
    %8 = arith.muli %arg1, %c24_i32 : i32
    %9 = vector.broadcast %8 : i32 to vector<1x24x1xi32>
    %10 = arith.addi %7, %9 : vector<1x24x1xi32>
    %c20_i32 = arith.constant 20 : i32
    %11 = vector.broadcast %c20_i32 : i32 to vector<1x24x1xi32>
    %12 = arith.cmpi slt, %10, %11 : vector<1x24x1xi32>
    %cst = arith.constant 0.000000e+00 : f32
    %13 = vector.shape_cast %12 : vector<1x24x1xi1> to vector<1x24x1xi1>
    %14 = vector.broadcast %13 : vector<1x24x1xi1> to vector<2x24x32xi1>
    %15 = vector.broadcast %cst : f32 to vector<2x24x32xf32>
    %16 = arith.select %14, %3, %15 : vector<2x24x32xi1>, vector<2x24x32xf32>
    %17 = vector.broadcast %5 : vector<1x1x32xf32> to vector<2x24x32xf32>
    %18 = arith.mulf %16, %17 : vector<2x24x32xf32>
    %cst_7 = arith.constant dense<0.000000e+00> : vector<2x24xf32>
    %19 = vector.multi_reduction <add>, %18, %cst_7 [2] : vector<2x24x32xf32> to vector<2x24xf32>
    %20 = vector.shape_cast %19 : vector<2x24xf32> to vector<2x24x1xf32>
    %21 = vector.broadcast %6 : f32 to vector<2x24x1xf32>
    %22 = arith.addf %20, %21 : vector<2x24x1xf32>
    %cst_8 = arith.constant -1.000000e+30 : f32
    %23 = vector.shape_cast %12 : vector<1x24x1xi1> to vector<1x24x1xi1>
    %24 = vector.broadcast %23 : vector<1x24x1xi1> to vector<2x24x1xi1>
    %25 = vector.broadcast %cst_8 : f32 to vector<2x24x1xf32>
    %26 = arith.select %24, %22, %25 : vector<2x24x1xi1>, vector<2x24x1xf32>
    %c0_9 = arith.constant 0 : index
    %c0_10 = arith.constant 0 : index
    %c0_11 = arith.constant 0 : index
    %27 = vector.load %arg6[%c0_9, %c0_10, %c0_11] : memref<2x1x1xf32, #tpu.memory_space<vmem>>, vector<2x1x1xf32>
    %cst_12 = arith.constant dense<0xFF800000> : vector<2x1xf32>
    %28 = vector.multi_reduction <maximumf>, %26, %cst_12 [1] : vector<2x24x1xf32> to vector<2x1xf32>
    %29 = vector.shape_cast %28 : vector<2x1xf32> to vector<2x1x1xf32>
    %30 = arith.maximumf %27, %29 : vector<2x1x1xf32>
    %31 = arith.subf %27, %30 : vector<2x1x1xf32>
    %32 = math.exp %31 : vector<2x1x1xf32>
    %33 = vector.broadcast %30 : vector<2x1x1xf32> to vector<2x24x1xf32>
    %34 = arith.subf %26, %33 : vector<2x24x1xf32>
    %35 = math.exp %34 : vector<2x24x1xf32>
    %c0_13 = arith.constant 0 : index
    %c0_14 = arith.constant 0 : index
    %c0_15 = arith.constant 0 : index
    %36 = vector.load %arg7[%c0_13, %c0_14, %c0_15] : memref<2x1x1xf32, #tpu.memory_space<vmem>>, vector<2x1x1xf32>
    %37 = arith.mulf %32, %36 : vector<2x1x1xf32>
    %cst_16 = arith.constant dense<0.000000e+00> : vector<2x1xf32>
    %38 = vector.multi_reduction <add>, %35, %cst_16 [1] : vector<2x24x1xf32> to vector<2x1xf32>
    %39 = vector.shape_cast %38 : vector<2x1xf32> to vector<2x1x1xf32>
    %40 = arith.addf %37, %39 : vector<2x1x1xf32>
    %c0_17 = arith.constant 0 : index
    %c0_18 = arith.constant 0 : index
    %c0_19 = arith.constant 0 : index
    %41 = vector.load %arg7[%c0_17, %c0_18, %c0_19] : memref<2x1x1xf32, #tpu.memory_space<vmem>>, vector<2x1x1xf32>
    tpu.vector_store %arg7[%c0_17, %c0_18, %c0_19], %40 {strides = array<i32>} : memref<2x1x1xf32, #tpu.memory_space<vmem>>, vector<2x1x1xf32>,
    %c0_20 = arith.constant 0 : index
    %c0_21 = arith.constant 0 : index
    %c0_22 = arith.constant 0 : index
    %42 = vector.load %arg8[%c0_20, %c0_21, %c0_22] : memref<2x1x32xf32, #tpu.memory_space<vmem>>, vector<2x1x32xf32>
    %43 = vector.broadcast %32 : vector<2x1x1xf32> to vector<2x1x32xf32>
    %44 = arith.mulf %43, %42 : vector<2x1x32xf32>
    %45 = vector.broadcast %35 : vector<2x24x1xf32> to vector<2x24x32xf32>
    %46 = arith.mulf %16, %45 : vector<2x24x32xf32>
    %cst_23 = arith.constant dense<0.000000e+00> : vector<2x32xf32>
    %47 = vector.multi_reduction <add>, %46, %cst_23 [1] : vector<2x24x32xf32> to vector<2x32xf32>
    %48 = vector.shape_cast %47 : vector<2x32xf32> to vector<2x1x32xf32>
    %49 = arith.addf %44, %48 : vector<2x1x32xf32>
    %c0_24 = arith.constant 0 : index
    %c0_25 = arith.constant 0 : index
    %c0_26 = arith.constant 0 : index
    %50 = vector.load %arg8[%c0_24, %c0_25, %c0_26] : memref<2x1x32xf32, #tpu.memory_space<vmem>>, vector<2x1x32xf32>
    tpu.vector_store %arg8[%c0_24, %c0_25, %c0_26], %49 {strides = array<i32>} : memref<2x1x32xf32, #tpu.memory_space<vmem>>, vector<2x1x32xf32>,
    %c0_27 = arith.constant 0 : index
    %c0_28 = arith.constant 0 : index
    %c0_29 = arith.constant 0 : index
    %51 = vector.load %arg6[%c0_27, %c0_28, %c0_29] : memref<2x1x1xf32, #tpu.memory_space<vmem>>, vector<2x1x1xf32>
    tpu.vector_store %arg6[%c0_27, %c0_28, %c0_29], %30 {strides = array<i32>} : memref<2x1x1xf32, #tpu.memory_space<vmem>>, vector<2x1x1xf32>,
    %c0_i32_30 = arith.constant 0 : i32
    %52 = arith.cmpi eq, %arg1, %c0_i32_30 : i32
    %53 = arith.extui %52 : i1 to i32
    %c0_i32_31 = arith.constant 0 : i32
    %54 = arith.cmpi ne, %53, %c0_i32_31 : i32
    scf.if %54 {
      %c0_32 = arith.constant 0 : index
      %c0_33 = arith.constant 0 : index
      %c0_34 = arith.constant 0 : index
      %55 = vector.load %arg7[%c0_32, %c0_33, %c0_34] : memref<2x1x1xf32, #tpu.memory_space<vmem>>, vector<2x1x1xf32>
      %56 = tpu.reciprocal %55 : vector<2x1x1xf32> -> vector<2x1x1xf32>
      %c0_35 = arith.constant 0 : index
      %c0_36 = arith.constant 0 : index
      %c0_37 = arith.constant 0 : index
      %57 = vector.load %arg8[%c0_35, %c0_36, %c0_37] : memref<2x1x32xf32, #tpu.memory_space<vmem>>, vector<2x1x32xf32>
      %58 = vector.broadcast %56 : vector<2x1x1xf32> to vector<2x1x32xf32>
      %59 = arith.mulf %57, %58 : vector<2x1x32xf32>
      %c0_38 = arith.constant 0 : index
      %c0_39 = arith.constant 0 : index
      %c0_40 = arith.constant 0 : index
      %60 = vector.load %arg5[%c0_38, %c0_39, %c0_40] : memref<2x1x32xf32, #tpu.memory_space<vmem>>, vector<2x1x32xf32>
      tpu.vector_store %arg5[%c0_38, %c0_39, %c0_40], %59 {strides = array<i32>} : memref<2x1x32xf32, #tpu.memory_space<vmem>>, vector<2x1x32xf32>,
    } else {
    }
    return
  }
  func.func @transform_0(%arg0: i32, %arg1: i32) -> (i32, i32, i32) {
    %c0_i32 = arith.constant 0 : i32
    %c0_i32_0 = arith.constant 0 : i32
    return %arg0, %arg1, %c0_i32 : i32, i32, i32
  }
  func.func @transform_1(%arg0: i32, %arg1: i32) -> (i32, i32) {
    %c0_i32 = arith.constant 0 : i32
    %c0_i32_0 = arith.constant 0 : i32
    %c0_i32_1 = arith.constant 0 : i32
    return %c0_i32, %c0_i32_0 : i32, i32
  }
  func.func @transform_2(%arg0: i32, %arg1: i32) -> (i32, i32) {
    %c0_i32 = arith.constant 0 : i32
    %c0_i32_0 = arith.constant 0 : i32
    %c0_i32_1 = arith.constant 0 : i32
    return %c0_i32, %c0_i32_0 : i32, i32
  }
  func.func @transform_3(%arg0: i32, %arg1: i32) -> (i32, i32, i32) {
    %c0_i32 = arith.constant 0 : i32
    %c0_i32_0 = arith.constant 0 : i32
    %c0_i32_1 = arith.constant 0 : i32
    return %arg0, %c0_i32, %c0_i32_0 : i32, i32, i32
  }
}

</mosaic_0001>

<llo_original>
// kernel: tpu_custom_call.1
$region0: #{tpu_custom_call.1}
  #allocation0 [shape = 'u32[]', space=smem, size = 0x4, offset = 0x4, fixed_abs, tag = 'smem constant byte address 0x4 - core index']
  #allocation1 [shape = 'u32[72,128]{1,0:T(1,128)}', space=vmem, size = 0x9000, scoped, tag = 'internal scratch']
  #allocation2 [shape = 'f32[2,1,1]{2,1,0:T(1,128)}', space=vmem, size = 0x400, scoped, tag = 'scratch operand']
  #allocation3 [shape = 'f32[2,1,1]{2,1,0:T(1,128)}', space=vmem, size = 0x400, scoped, tag = 'scratch operand']
  #allocation4 [shape = 'f32[2,1,32]{2,1,0:T(1,128)}', space=vmem, size = 0x400, scoped, tag = 'scratch operand']
  #allocation5 [shape = 'f32[1,1]{1,0:T(1,128)S(6)}', space=smem, size = 0x200, scoped, tag = 'scoped memory for tpu_custom_call.1']
  %s0 = inlined_call_operand.vmem [shape: f32[2,20,32], index: 0, kind: input, shape index: {}]
  %s1 = inlined_call_operand.vmem [shape: f32[1,32], index: 1, kind: input, shape index: {}]
  %s2 = inlined_call_operand.<no memory space> [shape: f32[1,1], index: 2, kind: input, shape index: {}]
  %s3 = inlined_call_operand.hbm [shape: f32[2,1,32], index: 3, kind: output, shape index: {}]
  %s4 = sld [smem:[#allocation0]]
  $region30: #{tpu_custom_call.1} parent=0
    _
  %s6 = ssub.s32 1, %s4
  %s7 = scalar_select 0, %s6, %s4
  %8 = sst [smem:[#allocation5]] %s2
  $region1: #{tpu_custom_call.1} parent=0
    #allocation6 [shape = 'u8[1024]{0}', space=vmem, size = 0x400, scoped, tag = 'output window, operand 0, single buffered']
    #allocation7 [shape = 's32[1]{0}', space=sflag, size = 0x4, scoped, tag = 'scoped memory for tpu_custom_call.1']
    %9 = vsyncpa [#allocation7], 0
    // Predicated region
    $region2: #{tpu_custom_call.1} parent=1 // pred_check
      _
    $region3: #{tpu_custom_call.1} parent=1 // pred_check_branch
      %11 = sbr.rel (0) target = $region5
    $region4: #{tpu_custom_call.1} parent=1 // pred_region
      _
    $region5: #{tpu_custom_call.1} parent=1 // pred_fallthru
      _
    // Predicated region
    $region6: #{tpu_custom_call.1} parent=1 // pred_check
      _
    $region7: #{tpu_custom_call.1} parent=1 // pred_check_branch
      %13 = sbr.rel (0) target = $region9
    $region8: #{tpu_custom_call.1} parent=1 // pred_region
      _
    $region9: #{tpu_custom_call.1} parent=1 // pred_fallthru
      _
    // Predicated region
    $region10: #{tpu_custom_call.1} parent=1 // pred_check
      _
    $region11: #{tpu_custom_call.1} parent=1 // pred_check_branch
      %15 = sbr.rel (0) target = $region13
    $region12: #{tpu_custom_call.1} parent=1 // pred_region
      _
    $region13: #{tpu_custom_call.1} parent=1 // pred_fallthru
      _
    %p16 = scmp.eq.s32.totalorder 0, 0
    // Predicated region
    $region14: #{tpu_custom_call.1} parent=1 // pred_check
      %p17 = pneg %p16
    $region15: #{tpu_custom_call.1} parent=1 // pred_check_branch
      %19 = sbr.rel (%p17) target = $region17
    $region16: #{tpu_custom_call.1} parent=1 // pred_region
      %vm20 = vcmask 0
      %21 = vst.msk [vmem:[#allocation2] sm:$0x1] %vm20, -1e+30
      %22 = vst.msk [vmem:[#allocation2 + $0x1] sm:$0x1] %vm20, -1e+30
      %23 = vst.msk [vmem:[#allocation3] sm:$0x1] %vm20, 0.0
      %24 = vst.msk [vmem:[#allocation3 + $0x1] sm:$0x1] %vm20, 0.0
      %vm25 = vcmask 253952
      %26 = vst.msk [vmem:[#allocation4] sm:$0x1] %vm25, 0.0
      %27 = vst.msk [vmem:[#allocation4 + $0x1] sm:$0x1] %vm25, 0.0
    $region17: #{tpu_custom_call.1} parent=1 // pred_fallthru
      _
    %v28 = vld [vmem:[%s0] sm:$0xff]
    %v29 = vld [vmem:[%s0 + $0x8] sm:$0xff]
    %v30 = vld [vmem:[%s0 + $0x10] sm:$0xff]
    %v31 = vld [vmem:[%s0 + $0x18] sm:$0xff]
    %v32 = vld [vmem:[%s0 + $0x20] sm:$0xff]
    %v33 = vld [vmem:[%s0 + $0x28] sm:$0xff]
    %v34 = vld [vmem:[%s1] sm:$0x1]
    %s35 = sld [smem:[#allocation5]]
    %v36 = vlaneseq
    %v37 = vshrl.u32 %v36, 7
    %v38 = vadd.s32 %v37, 8
    %v39 = vadd.s32 %v37, 16
    %s40 = smul.u32 0, 24
    %v41 = vstv %s40
    %v42 = vadd.s32 %v37, %v41
    %v43 = vadd.s32 %v38, %v41
    %v44 = vadd.s32 %v39, %v41
    %vm45 = vcmp.lt.s32.totalorder %v42, 20
    %vm46 = vcmp.lt.s32.totalorder %v43, 20
    %vm47 = vcmp.lt.s32.totalorder %v44, 20
    %v48 = vsel %vm45, 1, 0
    %v49 = vsel %vm46, 1, 0
    %v50 = vsel %vm47, 1, 0
    %vm51 = vcmp.eq.s32.totalorder %v48, 1
    %vm52 = vcmp.eq.s32.totalorder %v49, 1
    %vm53 = vcmp.eq.s32.totalorder %v50, 1
    %v54 = vsel %vm51, %v28, 0.0
    %v55 = vsel %vm52, %v29, 0.0
    %v56 = vsel %vm53, %v30, 0.0
    %v57 = vsel %vm51, %v31, 0.0
    %v58 = vsel %vm52, %v32, 0.0
    %v59 = vsel %vm53, %v33, 0.0
    %v61 = vperm.slane %v34, 0
    %v63 = vmul.f32 %v54, %v61
    %v64 = vmul.f32 %v55, %v61
    %v65 = vmul.f32 %v56, %v61
    %v66 = vmul.f32 %v57, %v61
    %v67 = vmul.f32 %v58, %v61
    %v68 = vmul.f32 %v59, %v61
    %vm69 = vcmask 261120
    %v70 = vsel %vm69, %v63, 0.0
    %71 = vadd.xlane.f32.xlu0 %v70
    %v72 = vpop.xlane.xlu0 %71
    %v73 = vsel %vm69, %v64, 0.0
    %74 = vadd.xlane.f32.xlu0 %v73
    %v75 = vpop.xlane.xlu0 %74
    %v76 = vsel %vm69, %v65, 0.0
    %77 = vadd.xlane.f32.xlu0 %v76
    %v78 = vpop.xlane.xlu0 %77
    %v79 = vsel %vm69, %v66, 0.0
    %80 = vadd.xlane.f32.xlu0 %v79
    %v81 = vpop.xlane.xlu0 %80
    %v82 = vsel %vm69, %v67, 0.0
    %83 = vadd.xlane.f32.xlu0 %v82
    %v84 = vpop.xlane.xlu0 %83
    %v85 = vsel %vm69, %v68, 0.0
    %86 = vadd.xlane.f32.xlu0 %v85
    %v87 = vpop.xlane.xlu0 %86
    %v88 = vstv %s35
    %v89 = vadd.f32 %v72, %v88
    %v90 = vadd.f32 %v75, %v88
    %v91 = vadd.f32 %v78, %v88
    %v92 = vadd.f32 %v81, %v88
    %v93 = vadd.f32 %v84, %v88
    %v94 = vadd.f32 %v87, %v88
    %v95 = vsel %vm51, %v89, -1e+30
    %v96 = vsel %vm52, %v90, -1e+30
    %v97 = vsel %vm53, %v91, -1e+30
    %v98 = vsel %vm51, %v92, -1e+30
    %v99 = vsel %vm52, %v93, -1e+30
    %v100 = vsel %vm53, %v94, -1e+30
    %v101 = vld [vmem:[#allocation2] sm:$0x1]
    %v102 = vld [vmem:[#allocation2 + $0x1] sm:$0x1]
    %v103 = vmax.f32 %v95, %v97
    %v104 = vmax.f32 %v103, %v96
    %v105 = vrot.slane %v104, 4
    %v106 = vmax.f32 %v104, %v105
    %v107 = vrot.slane %v106, 2
    %v108 = vmax.f32 %v106, %v107
    %v109 = vrot.slane %v108, 1
    %v110 = vmax.f32 %v108, %v109
    %v111 = vmax.f32 %v98, %v100
    %v112 = vmax.f32 %v111, %v99
    %v113 = vrot.slane %v112, 4
    %v114 = vmax.f32 %v112, %v113
    %v115 = vrot.slane %v114, 2
    %v116 = vmax.f32 %v114, %v115
    %v117 = vrot.slane %v116, 1
    %v118 = vmax.f32 %v116, %v117
    %v119 = vmax.f32 %v101, %v110
    %v120 = vmax.f32 %v102, %v118
    %v121 = vsub.f32 %v101, %v119
    %v122 = vsub.f32 %v102, %v120
    %v123 = vmul.f32 %v121, 1.442695
    %v124 = vpow.pop %v123
    %v125 = vmul.f32 %v122, 1.442695
    %v126 = vpow.pop %v125
    %v129 = vperm.slane %v119, 0
    %v130 = vperm.slane %v120, 0
    %v133 = vsub.f32 %v95, %v129
    %v134 = vsub.f32 %v96, %v129
    %v135 = vsub.f32 %v97, %v129
    %v136 = vsub.f32 %v98, %v130
    %v137 = vsub.f32 %v99, %v130
    %v138 = vsub.f32 %v100, %v130
    %v139 = vmul.f32 %v133, 1.442695
    %v140 = vpow.pop %v139
    %v141 = vmul.f32 %v134, 1.442695
    %v142 = vpow.pop %v141
    %v143 = vmul.f32 %v135, 1.442695
    %v144 = vpow.pop %v143
    %v145 = vmul.f32 %v136, 1.442695
    %v146 = vpow.pop %v145
    %v147 = vmul.f32 %v137, 1.442695
    %v148 = vpow.pop %v147
    %v149 = vmul.f32 %v138, 1.442695
    %v150 = vpow.pop %v149
    %v151 = vld [vmem:[#allocation3] sm:$0x1]
    %v152 = vld [vmem:[#allocation3 + $0x1] sm:$0x1]
    %v153 = vmul.f32 %v124, %v151
    %v154 = vmul.f32 %v126, %v152
    %vm155 = vcmask 7168
    %v156 = vsel %vm155, %v140, 0.0
    %v157 = vsel %vm155, %v142, 0.0
    %v158 = vadd.f32 %v156, %v157
    %v159 = vsel %vm155, %v144, 0.0
    %v160 = vadd.f32 %v158, %v159
    %v161 = vrot.slane %v160, 4
    %v162 = vadd.f32 %v160, %v161
    %v163 = vrot.slane %v162, 2
    %v164 = vadd.f32 %v162, %v163
    %v165 = vrot.slane %v164, 1
    %v166 = vadd.f32 %v164, %v165
    %v167 = vsel %vm155, %v146, 0.0
    %v168 = vsel %vm155, %v148, 0.0
    %v169 = vadd.f32 %v167, %v168
    %v170 = vsel %vm155, %v150, 0.0
    %v171 = vadd.f32 %v169, %v170
    %v172 = vrot.slane %v171, 4
    %v173 = vadd.f32 %v171, %v172
    %v174 = vrot.slane %v173, 2
    %v175 = vadd.f32 %v173, %v174
    %v176 = vrot.slane %v175, 1
    %v177 = vadd.f32 %v175, %v176
    %v178 = vadd.f32 %v153, %v166
    %v179 = vadd.f32 %v154, %v177
    %vm180 = vcmask 0
    %181 = vst.msk [vmem:[#allocation3] sm:$0x1] %vm180, %v178
    %182 = vst.msk [vmem:[#allocation3 + $0x1] sm:$0x1] %vm180, %v179
    %v183 = vld [vmem:[#allocation4] sm:$0x1]
    %v184 = vld [vmem:[#allocation4 + $0x1] sm:$0x1]
    %186 = vset.pattern.permute.xlu0 0
    %187 = vperm.xlu0 %186, %v124
    %v188 = vpop.permute.xlu0 %187
    %v190 = vperm.slane %v188, 0
    %192 = vset.pattern.permute.xlu0 0
    %193 = vperm.xlu0 %192, %v126
    %v194 = vpop.permute.xlu0 %193
    %v196 = vperm.slane %v194, 0
    %v197 = vmul.f32 %v190, %v183
    %v198 = vmul.f32 %v196, %v184
    %200 = vset.pattern.permute.xlu0 0
    %201 = vperm.xlu0 %200, %v140
    %v202 = vpop.permute.xlu0 %201
    %205 = vset.pattern.permute.xlu0 0
    %206 = vperm.xlu0 %205, %v142
    %v207 = vpop.permute.xlu0 %206
    %210 = vset.pattern.permute.xlu0 0
    %211 = vperm.xlu0 %210, %v144
    %v212 = vpop.permute.xlu0 %211
    %215 = vset.pattern.permute.xlu0 0
    %216 = vperm.xlu0 %215, %v146
    %v217 = vpop.permute.xlu0 %216
    %220 = vset.pattern.permute.xlu0 0
    %221 = vperm.xlu0 %220, %v148
    %v222 = vpop.permute.xlu0 %221
    %225 = vset.pattern.permute.xlu0 0
    %226 = vperm.xlu0 %225, %v150
    %v227 = vpop.permute.xlu0 %226
    %v229 = vmul.f32 %v54, %v202
    %v230 = vmul.f32 %v55, %v207
    %v231 = vmul.f32 %v56, %v212
    %v232 = vmul.f32 %v57, %v217
    %v233 = vmul.f32 %v58, %v222
    %v234 = vmul.f32 %v59, %v227
    %v235 = vsel %vm69, %v229, 0.0
    %v236 = vsel %vm69, %v230, 0.0
    %v237 = vadd.f32 %v235, %v236
    %v238 = vsel %vm69, %v231, 0.0
    %v239 = vadd.f32 %v237, %v238
    %v240 = vrot.slane %v239, 4
    %v241 = vadd.f32 %v239, %v240
    %v242 = vrot.slane %v241, 2
    %v243 = vadd.f32 %v241, %v242
    %v244 = vrot.slane %v243, 1
    %v245 = vadd.f32 %v243, %v244
    %v246 = vsel %vm69, %v232, 0.0
    %v247 = vsel %vm69, %v233, 0.0
    %v248 = vadd.f32 %v246, %v247
    %v249 = vsel %vm69, %v234, 0.0
    %v250 = vadd.f32 %v248, %v249
    %v251 = vrot.slane %v250, 4
    %v252 = vadd.f32 %v250, %v251
    %v253 = vrot.slane %v252, 2
    %v254 = vadd.f32 %v252, %v253
    %v255 = vrot.slane %v254, 1
    %v256 = vadd.f32 %v254, %v255
    %v257 = vadd.f32 %v197, %v245
    %v258 = vadd.f32 %v198, %v256
    %vm259 = vcmask 253952
    %260 = vst.msk [vmem:[#allocation4] sm:$0x1] %vm259, %v257
    %261 = vst.msk [vmem:[#allocation4 + $0x1] sm:$0x1] %vm259, %v258
    %262 = vst.msk [vmem:[#allocation2] sm:$0x1] %vm180, %v119
    %263 = vst.msk [vmem:[#allocation2 + $0x1] sm:$0x1] %vm180, %v120
    // Predicated region
    $region18: #{tpu_custom_call.1} parent=1 // pred_check
      %p264 = pneg %p16
    $region19: #{tpu_custom_call.1} parent=1 // pred_check_branch
      %266 = sbr.rel (%p264) target = $region21
    $region20: #{tpu_custom_call.1} parent=1 // pred_region
      %v267 = vld [vmem:[#allocation3] sm:$0x1]
      %v268 = vld [vmem:[#allocation3 + $0x1] sm:$0x1]
      %v269 = vrcp.pop %v267
      %v270 = vmul.f32 %v267, %v269
      %v271 = vsub.f32 1.0, %v270
      %v272 = vmul.f32 %v269, %v271
      %v273 = vadd.f32 %v269, %v272
      %vm274 = vweird.f32 %v267
      %vm275 = vweird.f32 %v269
      %vm276 = vmor %vm274, %vm275
      %v277 = vsel %vm276, %v269, %v273
      %v278 = vand.u32 2147483647, %v267
      %vm279 = vcmp.eq.f32.partialorder %v278, 8.507059e+37
      %v280 = vand.u32 %v267, 2147483648
      %v281 = vor.u32 1.1754944e-38, %v280
      %v282 = vsel %vm279, %v281, %v277
      %v283 = vrcp.pop %v268
      %v284 = vmul.f32 %v268, %v283
      %v285 = vsub.f32 1.0, %v284
      %v286 = vmul.f32 %v283, %v285
      %v287 = vadd.f32 %v283, %v286
      %vm288 = vweird.f32 %v268
      %vm289 = vweird.f32 %v283
      %vm290 = vmor %vm288, %vm289
      %v291 = vsel %vm290, %v283, %v287
      %v292 = vand.u32 2147483647, %v268
      %vm293 = vcmp.eq.f32.partialorder %v292, 8.507059e+37
      %v294 = vand.u32 %v268, 2147483648
      %v295 = vor.u32 1.1754944e-38, %v294
      %v296 = vsel %vm293, %v295, %v291
      %v297 = vld [vmem:[#allocation4] sm:$0x1]
      %v298 = vld [vmem:[#allocation4 + $0x1] sm:$0x1]
      %300 = vset.pattern.permute.xlu0 0
      %301 = vperm.xlu0 %300, %v282
      %v302 = vpop.permute.xlu0 %301
      %v304 = vperm.slane %v302, 0
      %306 = vset.pattern.permute.xlu0 0
      %307 = vperm.xlu0 %306, %v296
      %v308 = vpop.permute.xlu0 %307
      %v310 = vperm.slane %v308, 0
      %v311 = vmul.f32 %v297, %v304
      %v312 = vmul.f32 %v298, %v310
      %313 = vst.msk [vmem:[#allocation6] sm:$0x1] %vm259, %v311
      %314 = vst.msk [vmem:[#allocation6 + $0x1] sm:$0x1] %vm259, %v312
    $region21: #{tpu_custom_call.1} parent=1 // pred_fallthru
      _
    // Predicated region
    $region22: #{tpu_custom_call.1} parent=1 // pred_check
      _
    $region23: #{tpu_custom_call.1} parent=1 // pred_check_branch
      %316 = sbr.rel (0) target = $region25
    $region24: #{tpu_custom_call.1} parent=1 // pred_region
      %318 = vsyncadd [#allocation7], 0
      %s319 = sshll.u32 [#allocation6], 4
      %s320 = int_to_ptr.vmem [resolvable:$true] %s319
      %s321 = sshll.u32 %s3, 4
      %s322 = int_to_ptr.hbm [resolvable:$true] %s321
      %327 = dma.vmem_to_hbm [thread:$0]  %s320, 32, %s322, [#allocation7], 16, 16, 1
    $region25: #{tpu_custom_call.1} parent=1 // pred_fallthru
      _
    // Predicated region
    $region26: #{tpu_custom_call.1} parent=1 // pred_check
      _
    $region27: #{tpu_custom_call.1} parent=1 // pred_check_branch
      %329 = sbr.rel (0) target = $region29
    $region28: #{tpu_custom_call.1} parent=1 // pred_region
      %331 = dma.done [#allocation7], 32
    $region29: #{tpu_custom_call.1} parent=1 // pred_fallthru
      _
    %332 = vsyncpa [#allocation7], 1

</llo_original>
